<compile_context>
chip_gen: v7x
topology: tpu7x:2x2x1
jax: 0.10.0
libtpu: 0.0.40
codegen_flags: <defaults>
</compile_context>

<pallas_src>
import functools

import jax
import jax.numpy as jnp
from jax.experimental import pallas as pl
from jax.experimental.pallas import tpu as pltpu


def _weighted_loss_kernel(prob_ref, tgt_ref, out_ref, acc_ref, *, n_total, tn):
    """Accumulates sum_i log(probability[i, target[i]]) over row tiles."""
    i = pl.program_id(0)

    @pl.when(i == 0)
    def _():
        acc_ref[...] = jnp.zeros_like(acc_ref)

    prob = prob_ref[...].astype(jnp.float32)     # (tn, V) cast in VMEM (no HBM copy)
    tgt = tgt_ref[...]                           # (tn, 1) int32

    # probability.gather(-1, target.unsqueeze(1)) via one-hot mask + lane reduce.
    col = jax.lax.broadcasted_iota(jnp.int32, prob.shape, 1)      # (tn, V)
    onehot = col == tgt                                           # (tn, V)
    target_prob = jnp.sum(jnp.where(onehot, prob, 0.0),
                          axis=1, keepdims=True)                  # (tn, 1)

    # Rows past n_total (padded tail of the last block) hold garbage -> mask them.
    row = jax.lax.broadcasted_iota(jnp.int32, target_prob.shape, 0) + i * tn
    logp = jnp.where(row < n_total, jnp.log(target_prob), 0.0)    # (tn, 1)

    acc_ref[...] += jnp.sum(logp, keepdims=True)                  # (1, 1)

    @pl.when(i == pl.num_programs(0) - 1)
    def _():
        out_ref[...] = acc_ref[...]


def weighted_loss(probability, target, weight, reduction='sum', *,
                  max_tn=1024, prob_tile_budget_bytes=12 * 1024 * 1024):
    """Pallas equivalent of WeightedLoss.forward. Returns a scalar."""
    N, V = probability.shape
    itemsize = jnp.dtype(probability.dtype).itemsize

    # Sublane multiple for the probability tile (packed sub-32-bit dtypes).
    if itemsize >= 4:
        m = 8
    elif itemsize == 2:
        m = 16
    else:
        m = 32

    # Largest row tile whose double-buffered probability tile stays within the
    # budget (keeps v7x's smaller VMEM happy); also never exceed the (rounded)
    # row count so the grid stays sensible for tiny inputs.
    tn = prob_tile_budget_bytes // (2 * V * itemsize)
    tn = max(m, (tn // m) * m)
    n_rows_cap = (N // m) * m if N >= m else m
    tn = max(m, min(tn, max_tn, n_rows_cap))

    num_tiles = pl.cdiv(N, tn)
    tgt2d = target.astype(jnp.int32).reshape(N, 1)

    kernel = functools.partial(_weighted_loss_kernel, n_total=N, tn=tn)

    logp_sum = pl.pallas_call(
        kernel,
        out_shape=jax.ShapeDtypeStruct((1, 1), jnp.float32),
        grid_spec=pltpu.PrefetchScalarGridSpec(
            num_scalar_prefetch=0,
            grid=(num_tiles,),
            in_specs=[
                pl.BlockSpec((tn, V), lambda i: (i, 0)),   # probability tile
                pl.BlockSpec((tn, 1), lambda i: (i, 0)),   # target tile
            ],
            out_specs=pl.BlockSpec((1, 1), lambda i: (0, 0)),
            scratch_shapes=[pltpu.VMEM((1, 1), jnp.float32)],  # sum(log p_target)
        ),
        compiler_params=pltpu.CompilerParams(
            dimension_semantics=("arbitrary",),
            vmem_limit_bytes=32 * 1024 * 1024,   # safe on v5e/v6e/v7x
        ),
        cost_estimate=pl.CostEstimate(
            flops=4 * N * V,
            transcendentals=N,
            bytes_accessed=N * V * itemsize + N * 4 + 4,
        ),
    )(probability, tgt2d)[0, 0]

    # sum(weight[target]) only depends on (weight, target): compute it outside
    # the streaming kernel (removes a second V-wide masked reduce per row tile).
    alpha_sum = jnp.sum(jnp.take(weight, target).astype(jnp.float32))

    total = -alpha_sum * logp_sum          # == sum over the broadcast [N, N] focal_loss
    if reduction == 'sum':
        return total
    return total / jnp.float32(N * N)      # 'mean' over the [N, N] broadcast tensor


def _reference(probability, target, weight, reduction):
    n = probability.shape[0]
    tp = probability[jnp.arange(n), target][:, None]      # [N, 1]
    alpha = weight[target]                                 # [N]
    focal = -alpha * jnp.log(tp)                           # broadcast -> [N, N]
    return focal.sum() if reduction == 'sum' else focal.mean()


if __name__ == "__main__":
    key = jax.random.PRNGKey(0)
    k1, k2, k3 = jax.random.split(key, 3)

    N, V = 16, 128
    logits = jax.random.normal(k1, (N, V), dtype=jnp.float32)
    probability = jax.nn.softmax(logits, axis=-1)
    target = jax.random.randint(k2, (N,), 0, V, dtype=jnp.int32)
    weight = jax.random.uniform(k3, (V,), dtype=jnp.float32, minval=0.5, maxval=1.5)

    loss = jax.block_until_ready(weighted_loss(probability, target, weight, 'sum'))
    ref = _reference(probability, target, weight, 'sum')
    assert jnp.allclose(loss, ref, rtol=1e-4, atol=1e-4), (loss, ref)

    loss_m = jax.block_until_ready(weighted_loss(probability, target, weight, 'mean'))
    ref_m = _reference(probability, target, weight, 'mean')
    assert jnp.allclose(loss_m, ref_m, rtol=1e-4, atol=1e-4), (loss_m, ref_m)

    # Ragged N (exercises the in-kernel tail-masking path: N % tile != 0).
    k4, k5, k6 = jax.random.split(jax.random.PRNGKey(1), 3)
    N2, V2 = 20, 256
    prob2 = jax.nn.softmax(jax.random.normal(k4, (N2, V2), dtype=jnp.float32), axis=-1)
    tgt2 = jax.random.randint(k5, (N2,), 0, V2, dtype=jnp.int32)
    w2 = jax.random.uniform(k6, (V2,), dtype=jnp.float32, minval=0.5, maxval=1.5)
    loss2 = jax.block_until_ready(weighted_loss(prob2, tgt2, w2, 'sum'))
    ref2 = _reference(prob2, tgt2, w2, 'sum')
    assert jnp.allclose(loss2, ref2, rtol=1e-4, atol=1e-4), (loss2, ref2)

    print("KERNEL_OK")
</pallas_src>

<mosaic_0001>
module attributes {stable_mosaic.version = 11 : i64} {
  func.func @_weighted_loss_kernel(%arg0: i32, %arg1: memref<16x128xf32, #tpu.memory_space<vmem>>, %arg2: memref<16x1xi32, #tpu.memory_space<vmem>>, %arg3: memref<1x1xf32, #tpu.memory_space<vmem>>, %arg4: memref<1x1xf32, #tpu.memory_space<vmem>>) attributes {dimension_semantics = [#tpu.dimension_semantics<arbitrary>], iteration_bounds = array<i64: 1>, scalar_prefetch = 0 : i64, scratch_operands = 1 : i64, tpu.core_type = #tpu.core_type<tc>, window_params = [{transform_indices = @transform_0, window_bounds = array<i64: 16, 128>}, {transform_indices = @transform_1, window_bounds = array<i64: 16, 1>}, {pipeline_mode = #tpu.pipeline_mode<synchronous>, transform_indices = @transform_2, window_bounds = array<i64: 1, 1>}]} {
    %c0_i32 = arith.constant 0 : i32
    %0 = arith.cmpi eq, %arg0, %c0_i32 : i32
    %1 = arith.extui %0 : i1 to i32
    %c0_i32_0 = arith.constant 0 : i32
    %2 = arith.cmpi ne, %1, %c0_i32_0 : i32
    scf.if %2 {
      %cst_14 = arith.constant 0.000000e+00 : f32
      %32 = vector.broadcast %cst_14 : f32 to vector<1x1xf32>
      %c0_15 = arith.constant 0 : index
      %c0_16 = arith.constant 0 : index
      %33 = vector.load %arg4[%c0_15, %c0_16] : memref<1x1xf32, #tpu.memory_space<vmem>>, vector<1x1xf32>
      tpu.vector_store %arg4[%c0_15, %c0_16], %32 {strides = array<i32>} : memref<1x1xf32, #tpu.memory_space<vmem>>, vector<1x1xf32>,
    } else {
    }
    %c0 = arith.constant 0 : index
    %c0_1 = arith.constant 0 : index
    %3 = vector.load %arg1[%c0, %c0_1] : memref<16x128xf32, #tpu.memory_space<vmem>>, vector<16x128xf32>
    %c0_2 = arith.constant 0 : index
    %c0_3 = arith.constant 0 : index
    %4 = vector.load %arg2[%c0_2, %c0_3] : memref<16x1xi32, #tpu.memory_space<vmem>>, vector<16x1xi32>
    %5 = tpu.iota {dimensions = array<i32: 1>} : vector<16x128xi32>
    %6 = vector.broadcast %4 : vector<16x1xi32> to vector<16x128xi32>
    %7 = arith.cmpi eq, %5, %6 : vector<16x128xi32>
    %cst = arith.constant 0.000000e+00 : f32
    %8 = vector.broadcast %cst : f32 to vector<16x128xf32>
    %9 = arith.select %7, %3, %8 : vector<16x128xi1>, vector<16x128xf32>
    %cst_4 = arith.constant dense<0.000000e+00> : vector<16xf32>
    %10 = vector.multi_reduction <add>, %9, %cst_4 [1] : vector<16x128xf32> to vector<16xf32>
    %11 = vector.shape_cast %10 : vector<16xf32> to vector<16x1xf32>
    %12 = tpu.iota {dimensions = array<i32: 0>} : vector<16x1xi32>
    %c16_i32 = arith.constant 16 : i32
    %13 = arith.muli %arg0, %c16_i32 : i32
    %14 = vector.broadcast %13 : i32 to vector<16x1xi32>
    %15 = arith.addi %12, %14 : vector<16x1xi32>
    %c16_i32_5 = arith.constant 16 : i32
    %16 = vector.broadcast %c16_i32_5 : i32 to vector<16x1xi32>
    %17 = arith.cmpi slt, %15, %16 : vector<16x1xi32>
    %18 = math.log %11 : vector<16x1xf32>
    %cst_6 = arith.constant 0.000000e+00 : f32
    %19 = vector.broadcast %cst_6 : f32 to vector<16x1xf32>
    %20 = arith.select %17, %18, %19 : vector<16x1xi1>, vector<16x1xf32>
    %c0_7 = arith.constant 0 : index
    %c0_8 = arith.constant 0 : index
    %21 = vector.load %arg4[%c0_7, %c0_8] : memref<1x1xf32, #tpu.memory_space<vmem>>, vector<1x1xf32>
    %22 = vector.shape_cast %20 : vector<16x1xf32> to vector<1x16x1xf32>
    %cst_9 = arith.constant dense<0.000000e+00> : vector<1xf32>
    %23 = vector.multi_reduction <add>, %22, %cst_9 [1, 2] : vector<1x16x1xf32> to vector<1xf32>
    %24 = vector.shape_cast %23 : vector<1xf32> to vector<1x1x1xf32>
    %25 = vector.extract %24[0, 0, 0] : f32 from vector<1x1x1xf32>
    %26 = vector.broadcast %25 : f32 to vector<1x1xf32>
    %27 = arith.addf %21, %26 : vector<1x1xf32>
    %c0_10 = arith.constant 0 : index
    %c0_11 = arith.constant 0 : index
    %28 = vector.load %arg4[%c0_10, %c0_11] : memref<1x1xf32, #tpu.memory_space<vmem>>, vector<1x1xf32>
    tpu.vector_store %arg4[%c0_10, %c0_11], %27 {strides = array<i32>} : memref<1x1xf32, #tpu.memory_space<vmem>>, vector<1x1xf32>,
    %c0_i32_12 = arith.constant 0 : i32
    %29 = arith.cmpi eq, %arg0, %c0_i32_12 : i32
    %30 = arith.extui %29 : i1 to i32
    %c0_i32_13 = arith.constant 0 : i32
    %31 = arith.cmpi ne, %30, %c0_i32_13 : i32
    scf.if %31 {
      %c0_14 = arith.constant 0 : index
      %c0_15 = arith.constant 0 : index
      %32 = vector.load %arg4[%c0_14, %c0_15] : memref<1x1xf32, #tpu.memory_space<vmem>>, vector<1x1xf32>
      %c0_16 = arith.constant 0 : index
      %c0_17 = arith.constant 0 : index
      %33 = vector.load %arg3[%c0_16, %c0_17] : memref<1x1xf32, #tpu.memory_space<vmem>>, vector<1x1xf32>
      tpu.vector_store %arg3[%c0_16, %c0_17], %32 {strides = array<i32>} : memref<1x1xf32, #tpu.memory_space<vmem>>, vector<1x1xf32>,
    } else {
    }
    return
  }
  func.func @transform_0(%arg0: i32) -> (i32, i32) {
    %c0_i32 = arith.constant 0 : i32
    %c0_i32_0 = arith.constant 0 : i32
    return %arg0, %c0_i32 : i32, i32
  }
  func.func @transform_1(%arg0: i32) -> (i32, i32) {
    %c0_i32 = arith.constant 0 : i32
    %c0_i32_0 = arith.constant 0 : i32
    return %arg0, %c0_i32 : i32, i32
  }
  func.func @transform_2(%arg0: i32) -> (i32, i32) {
    %c0_i32 = arith.constant 0 : i32
    %c0_i32_0 = arith.constant 0 : i32
    %c0_i32_1 = arith.constant 0 : i32
    return %c0_i32, %c0_i32_0 : i32, i32
  }
}

</mosaic_0001>

<llo_original>
// kernel: tpu_custom_call.1
$region0: #{tpu_custom_call.1}
  #allocation0 [shape = 'u32[]', space=smem, size = 0x4, offset = 0x4, fixed_abs, tag = 'smem constant byte address 0x4 - core index']
  #allocation1 [shape = 'u32[144,128]{1,0:T(1,128)}', space=vmem, size = 0x12000, scoped, tag = 'internal scratch']
  #allocation2 [shape = 'f32[1,1]{1,0:T(1,128)}', space=vmem, size = 0x200, scoped, tag = 'scratch operand']
  %s0 = inlined_call_operand.vmem [shape: f32[16,128], index: 0, kind: input, shape index: {}]
  %s1 = inlined_call_operand.vmem [shape: s32[16,1], index: 1, kind: input, shape index: {}]
  %s2 = inlined_call_operand.hbm [shape: f32[1,1], index: 2, kind: output, shape index: {}]
  %s3 = sld [smem:[#allocation0]]
  $region26: #{tpu_custom_call.1} parent=0
    _
  %s5 = ssub.s32 1, %s3
  %s6 = scalar_select 0, %s5, %s3
  $region1: #{tpu_custom_call.1} parent=0
    #allocation3 [shape = 'u8[512]{0}', space=vmem, size = 0x400, scoped, tag = 'output window, operand 0, single buffered']
    #allocation4 [shape = 's32[1]{0}', space=sflag, size = 0x4, scoped, tag = 'scoped memory for tpu_custom_call.1']
    %7 = vsyncpa [#allocation4], 0
    // Predicated region
    $region2: #{tpu_custom_call.1} parent=1 // pred_check
      _
    $region3: #{tpu_custom_call.1} parent=1 // pred_check_branch
      %9 = sbr.rel (0) target = $region5
    $region4: #{tpu_custom_call.1} parent=1 // pred_region
      _
    $region5: #{tpu_custom_call.1} parent=1 // pred_fallthru
      _
    // Predicated region
    $region6: #{tpu_custom_call.1} parent=1 // pred_check
      _
    $region7: #{tpu_custom_call.1} parent=1 // pred_check_branch
      %11 = sbr.rel (0) target = $region9
    $region8: #{tpu_custom_call.1} parent=1 // pred_region
      _
    $region9: #{tpu_custom_call.1} parent=1 // pred_fallthru
      _
    %p12 = scmp.eq.s32.totalorder 0, 0
    // Predicated region
    $region10: #{tpu_custom_call.1} parent=1 // pred_check
      %p13 = pneg %p12
    $region11: #{tpu_custom_call.1} parent=1 // pred_check_branch
      %15 = sbr.rel (%p13) target = $region13
    $region12: #{tpu_custom_call.1} parent=1 // pred_region
      %vm16 = vcmask 0
      %17 = vst.msk [vmem:[#allocation2] sm:$0x1] %vm16, 0.0
    $region13: #{tpu_custom_call.1} parent=1 // pred_fallthru
      _
    %v18 = vld [vmem:[%s0] sm:$0xff]
    %v19 = vld [vmem:[%s0 + $0x8] sm:$0xff]
    %v20 = vld [vmem:[%s1] sm:$0xff]
    %v21 = vld [vmem:[%s1 + $0x8] sm:$0xff]
    %v22 = vlaneseq
    %v23 = vand.u32 %v22, 127
    %24 = vset.pattern.permute.xlu0 0
    %25 = vperm.xlu0 %24, %v20
    %v26 = vpop.permute.xlu0 %25
    %27 = vset.pattern.permute.xlu0 0
    %28 = vperm.xlu0 %27, %v21
    %v29 = vpop.permute.xlu0 %28
    %vm30 = vcmp.eq.s32.totalorder %v23, %v26
    %vm31 = vcmp.eq.s32.totalorder %v23, %v29
    %v32 = vsel %vm30, %v18, 0.0
    %v33 = vsel %vm31, %v19, 0.0
    %34 = vadd.xlane.f32.xlu0 %v32
    %v35 = vpop.xlane.xlu0 %34
    %36 = vadd.xlane.f32.xlu0 %v33
    %v37 = vpop.xlane.xlu0 %36
    %v38 = vlaneseq
    %v39 = vshrl.u32 %v38, 7
    %v40 = vadd.s32 %v39, 8
    %s41 = smul.u32 0, 16
    %v42 = vstv %s41
    %v43 = vadd.s32 %v39, %v42
    %v44 = vadd.s32 %v40, %v42
    %vm45 = vcmp.lt.s32.totalorder %v43, 16
    %vm46 = vcmp.lt.s32.totalorder %v44, 16
    %v47 = vlog2.pop %v35
    %v48 = vmul.f32 %v47, 0.6931472
    %v49 = vlog2.pop %v37
    %v50 = vmul.f32 %v49, 0.6931472
    %v51 = vsel %vm45, %v48, 0.0
    %v52 = vsel %vm46, %v50, 0.0
    %v53 = vld [vmem:[#allocation2] sm:$0x1]
    %vm54 = vcmask 7168
    %v55 = vsel %vm54, %v51, 0.0
    %v56 = vsel %vm54, %v52, 0.0
    %v57 = vadd.f32 %v55, %v56
    %58 = vadd.xlane.f32.xlu0 %v57
    %v59 = vpop.xlane.xlu0 %58
    %v60 = vrot.slane %v59, 4
    %v61 = vadd.f32 %v59, %v60
    %v62 = vrot.slane %v61, 2
    %v63 = vadd.f32 %v61, %v62
    %v64 = vrot.slane %v63, 1
    %v65 = vadd.f32 %v63, %v64
    %s66 = vtos %v65
    %v67 = vstv %s66
    %v68 = vadd.f32 %v53, %v67
    %vm69 = vcmask 0
    %70 = vst.msk [vmem:[#allocation2] sm:$0x1] %vm69, %v68
    // Predicated region
    $region14: #{tpu_custom_call.1} parent=1 // pred_check
      %p71 = pneg %p12
    $region15: #{tpu_custom_call.1} parent=1 // pred_check_branch
      %73 = sbr.rel (%p71) target = $region17
    $region16: #{tpu_custom_call.1} parent=1 // pred_region
      %v74 = vld [vmem:[#allocation2] sm:$0x1]
      %75 = vst.msk [vmem:[#allocation3] sm:$0x1] %vm69, %v74
    $region17: #{tpu_custom_call.1} parent=1 // pred_fallthru
      _
    // Predicated region
    $region18: #{tpu_custom_call.1} parent=1 // pred_check
      _
    $region19: #{tpu_custom_call.1} parent=1 // pred_check_branch
      %77 = sbr.rel (0) target = $region21
    $region20: #{tpu_custom_call.1} parent=1 // pred_region
      %s79 = ssub.s32 16, 16
      %80 = vsyncadd [#allocation4], %s79
      %s82 = sshll.u32 [#allocation3], 4
      %s83 = int_to_ptr.vmem [resolvable:$true] %s82
      %85 = dma.vmem_to_hbm [thread:$0]  %s83, 16, %s2, [#allocation4]
    $region21: #{tpu_custom_call.1} parent=1 // pred_fallthru
      _
    // Predicated region
    $region22: #{tpu_custom_call.1} parent=1 // pred_check
      _
    $region23: #{tpu_custom_call.1} parent=1 // pred_check_branch
      %87 = sbr.rel (0) target = $region25
    $region24: #{tpu_custom_call.1} parent=1 // pred_region
      %88 = dma.done [#allocation4], 16
    $region25: #{tpu_custom_call.1} parent=1 // pred_fallthru
      _
    %89 = vsyncpa [#allocation4], 1

</llo_original>
